<compile_context>
chip_gen: v7x
topology: tpu7x:2x2x1
jax: 0.10.0
libtpu: 0.0.40
codegen_flags: <defaults>
</compile_context>

<pallas_src>
import jax
import jax.numpy as jnp
from jax import lax
from jax.experimental import pallas as pl
from jax.experimental.pallas import tpu as pltpu


def _full_spec(shape):
    # whole-array block at the single grid point (no grid -> 0-arg index_map)
    return pl.BlockSpec(shape, lambda: tuple(0 for _ in shape))


# -------- full forward:  y = sigmoid(x @ (w1 @ w2) + (b1 @ w2 + b2)) ---------


def _folded_kernel(x_ref, w_ref, b_ref, out_ref):
    # bf16 x bf16 -> f32 accumulate on the MXU; bias + sigmoid in f32.
    x = x_ref[...].astype(jnp.bfloat16)
    y = jnp.dot(x, w_ref[...], preferred_element_type=jnp.float32)
    y = y + b_ref[...]
    out_ref[...] = jax.nn.sigmoid(y).astype(out_ref.dtype)


def fold_params(w1, b1, w2, b2):
    """Exact composition of the two linears (no nonlinearity in between).

    Fold in f32 at HIGHEST precision, then cast only the folded weight to
    bf16 (it dominates the per-call DMA).  Bias stays f32.  Do this once per
    weight set and reuse across forward calls.
    """
    w = jnp.dot(w1, w2, precision=lax.Precision.HIGHEST)                 # (D_in, D_out)
    b = jnp.dot(b1[None, :], w2, precision=lax.Precision.HIGHEST) + b2[None, :]
    return w.astype(jnp.bfloat16), b.astype(jnp.float32)                 # b: (1, D_out)


def _full_forward(x, w_fold, b_fold, *, batch_tile=256):
    B, d_in = x.shape
    d_out = w_fold.shape[1]
    cost = pl.CostEstimate(
        flops=2 * B * d_in * d_out + 2 * B * d_out,
        transcendentals=B * d_out,                 # sigmoid
        bytes_accessed=(4 * x.size + 2 * w_fold.size + 4 * b_fold.size
                        + 4 * B * d_out),
    )

    use_batch_grid = (B % batch_tile == 0) and (B >= 2 * batch_tile)
    if use_batch_grid:
        # Weight/bias keep block index (0, 0) -> DMA'd once, VMEM-resident;
        # x/out tiles pipeline across the batch grid; "parallel" lets v7x
        # shard batch tiles over both TensorCores.
        return pl.pallas_call(
            _folded_kernel,
            out_shape=jax.ShapeDtypeStruct((B, d_out), jnp.float32),
            grid=(B // batch_tile,),
            in_specs=[pl.BlockSpec((batch_tile, d_in), lambda i: (i, 0)),
                      pl.BlockSpec((d_in, d_out), lambda i: (0, 0)),
                      pl.BlockSpec((1, d_out), lambda i: (0, 0))],
            out_specs=pl.BlockSpec((batch_tile, d_out), lambda i: (i, 0)),
            compiler_params=pltpu.CompilerParams(
                dimension_semantics=("parallel",)),
            cost_estimate=cost,
        )(x, w_fold, b_fold)

    # Small batch: single grid point, everything resident, no per-step overhead.
    return pl.pallas_call(
        _folded_kernel,
        out_shape=jax.ShapeDtypeStruct((B, d_out), jnp.float32),
        in_specs=[_full_spec((B, d_in)),
                  _full_spec((d_in, d_out)),
                  _full_spec((1, d_out))],
        out_specs=_full_spec((B, d_out)),
        cost_estimate=cost,
    )(x, w_fold, b_fold)


# -------- hidden path:  flatten(x @ w1 + b1)  (linear2 never runs) -----------


def _hidden_kernel(x_ref, w1_ref, b1_ref, out_ref):
    h = jnp.dot(x_ref[...], w1_ref[...], preferred_element_type=jnp.float32)
    h = h + b1_ref[...]                              # (B, d_hid) f32
    B, d_hid = h.shape
    # Relay the (B, d_hid) block into one lane-dense (1, B*d_hid) row so the
    # HBM writeback is a single dense row (no masked/strided store) and the
    # wrapper's reshape(-1) becomes a free metadata op.  B is small & static,
    # so these are B static lane-offset stores within one output row.
    for b in range(B):
        out_ref[0:1, b * d_hid:(b + 1) * d_hid] = (
            h[b:b + 1, :].astype(out_ref.dtype))


def _hidden_forward(x, w1, b1_row):
    B, d_in = x.shape
    d_hid = w1.shape[1]
    cost = pl.CostEstimate(
        flops=2 * B * d_in * d_hid + B * d_hid,
        transcendentals=0,
        bytes_accessed=4 * (x.size + w1.size + b1_row.size + B * d_hid),
    )
    hid = pl.pallas_call(
        _hidden_kernel,
        out_shape=jax.ShapeDtypeStruct((1, B * d_hid), jnp.float32),
        in_specs=[_full_spec((B, d_in)),
                  _full_spec((d_in, d_hid)),
                  _full_spec((1, d_hid))],
        out_specs=_full_spec((1, B * d_hid)),
        cost_estimate=cost,
    )(x, w1, b1_row)
    # matches `torch.flatten(x)` on the hidden activations (free reshape)
    return hid.reshape(-1)


# -------- public wrapper ------------------------------------------------------


def dense_ae_forward(x, w1, b1, w2, b2, get_hidden=False, folded=None):
    """x: (B, D_in) f32.  w1: (D_in, D_hid), w2: (D_hid, D_out) (pre-transposed).

    `folded` may hold precomputed `fold_params(w1, b1, w2, b2)` to avoid
    re-folding on every call of the full path.
    """
    if get_hidden:
        return _hidden_forward(x, w1, b1.reshape(1, -1))
    if folded is None:
        folded = fold_params(w1, b1, w2, b2)
    return _full_forward(x, *folded)


def init_params(key, img_size):
    """Deterministic init mimicking nn.Linear default (U[-1/sqrt(fan_in), +])."""
    d_in = img_size * img_size
    # NOTE: same left-to-right evaluation as the PyTorch expression; exact for
    # img_size divisible by 4 (fragile otherwise, intentionally mirrored).
    d_hid = img_size // 4 * img_size // 4
    d_out = img_size * img_size

    k1, k2, k3, k4 = jax.random.split(key, 4)
    bound1 = 1.0 / jnp.sqrt(d_in)
    bound2 = 1.0 / jnp.sqrt(d_hid)
    # stored as (in, out) == W.T relative to PyTorch's (out, in)
    w1 = jax.random.uniform(k1, (d_in, d_hid), jnp.float32, -bound1, bound1)
    b1 = jax.random.uniform(k2, (d_hid,), jnp.float32, -bound1, bound1)
    w2 = jax.random.uniform(k3, (d_hid, d_out), jnp.float32, -bound2, bound2)
    b2 = jax.random.uniform(k4, (d_out,), jnp.float32, -bound2, bound2)
    return w1, b1, w2, b2


if __name__ == "__main__":
    img_size = 16          # -> D_in = D_out = 256, D_hid = 16
    batch = 8

    key = jax.random.PRNGKey(0)
    k_x, k_p, k_xb = jax.random.split(key, 3)
    x = jax.random.normal(k_x, (batch, img_size * img_size), jnp.float32)
    w1, b1, w2, b2 = init_params(k_p, img_size)

    # Fold once (f32 HIGHEST, weight cast to bf16), reuse across forward calls.
    folded = fold_params(w1, b1, w2, b2)

    # full forward (small batch -> single grid point)
    out = dense_ae_forward(x, w1, b1, w2, b2, get_hidden=False, folded=folded)
    out = jax.block_until_ready(out)

    ref = jax.nn.sigmoid((x @ w1 + b1) @ w2 + b2)
    assert out.shape == (batch, img_size * img_size)
    # fold reassociation + bf16 weight/activation quantization: post-sigmoid
    # error is ~1e-3-scale; 1e-2 is a safe-but-meaningful bound.
    assert jnp.max(jnp.abs(out - ref)) < 1e-2

    # full forward, large batch -> 1-D batch grid with resident bf16 weight
    big_batch = 512
    x_big = jax.random.normal(k_xb, (big_batch, img_size * img_size), jnp.float32)
    out_big = jax.block_until_ready(_full_forward(x_big, *folded))
    ref_big = jax.nn.sigmoid((x_big @ w1 + b1) @ w2 + b2)
    assert out_big.shape == (big_batch, img_size * img_size)
    assert jnp.max(jnp.abs(out_big - ref_big)) < 1e-2

    # hidden path (only linear1, lane-dense flattened output)
    hid = jax.block_until_ready(
        dense_ae_forward(x, w1, b1, w2, b2, get_hidden=True))
    hid_ref = (x @ w1 + b1).reshape(-1)
    assert hid.shape == (batch * (img_size // 4 * img_size // 4),)
    assert jnp.max(jnp.abs(hid - hid_ref)) < 1e-5

    print("KERNEL_OK")
</pallas_src>

<mosaic_0001>
module attributes {stable_mosaic.version = 11 : i64} {
  func.func @_folded_kernel(%arg0: memref<8x256xf32, #tpu.memory_space<vmem>>, %arg1: memref<256x256xbf16, #tpu.memory_space<vmem>>, %arg2: memref<1x256xf32, #tpu.memory_space<vmem>>, %arg3: memref<8x256xf32, #tpu.memory_space<vmem>>) attributes {dimension_semantics = [], scalar_prefetch = 0 : i64, scratch_operands = 0 : i64, tpu.core_type = #tpu.core_type<tc>} {
    %c0 = arith.constant 0 : index
    %c0_0 = arith.constant 0 : index
    %0 = vector.load %arg0[%c0, %c0_0] : memref<8x256xf32, #tpu.memory_space<vmem>>, vector<8x256xf32>
    %1 = arith.truncf %0 : vector<8x256xf32> to vector<8x256xbf16>
    %c0_1 = arith.constant 0 : index
    %c0_2 = arith.constant 0 : index
    %2 = vector.load %arg1[%c0_1, %c0_2] : memref<256x256xbf16, #tpu.memory_space<vmem>>, vector<256x256xbf16>
    %cst = arith.constant dense<0.000000e+00> : vector<8x256xf32>
    %3 = tpu.matmul %1, %2, %cst {dimension_numbers = #tpu.dot_dimension_numbers<[1], [0], [0], [1], [0, 0, 1, 1], [], []>} : vector<8x256xbf16>, vector<256x256xbf16>, vector<8x256xf32> -> vector<8x256xf32>
    %c0_3 = arith.constant 0 : index
    %c0_4 = arith.constant 0 : index
    %4 = vector.load %arg2[%c0_3, %c0_4] : memref<1x256xf32, #tpu.memory_space<vmem>>, vector<1x256xf32>
    %5 = vector.broadcast %4 : vector<1x256xf32> to vector<8x256xf32>
    %6 = arith.addf %3, %5 : vector<8x256xf32>
    %7 = arith.negf %6 : vector<8x256xf32>
    %8 = math.exp %7 : vector<8x256xf32>
    %cst_5 = arith.constant 1.000000e+00 : f32
    %9 = vector.broadcast %cst_5 : f32 to vector<8x256xf32>
    %10 = arith.addf %9, %8 : vector<8x256xf32>
    %11 = arith.divf %9, %10 : vector<8x256xf32>
    %c0_6 = arith.constant 0 : index
    %c0_7 = arith.constant 0 : index
    %12 = vector.load %arg3[%c0_6, %c0_7] : memref<8x256xf32, #tpu.memory_space<vmem>>, vector<8x256xf32>
    tpu.vector_store %arg3[%c0_6, %c0_7], %11 {strides = array<i32>} : memref<8x256xf32, #tpu.memory_space<vmem>>, vector<8x256xf32>,
    return
  }
}

</mosaic_0001>

<llo_original>
// kernel: tpu_custom_call.1
$region0: #{tpu_custom_call.1}
  #allocation0 [shape = 'u32[]', space=smem, size = 0x4, offset = 0x4, fixed_abs, tag = 'smem constant byte address 0x4 - core index']
  #allocation1 [shape = 'u32[144,128]{1,0:T(1,128)}', space=vmem, size = 0x12000, scoped, tag = 'internal scratch']
  %s0 = inlined_call_operand.hbm [shape: f32[8,256], index: 0, kind: input, shape index: {}]
  %s1 = inlined_call_operand.hbm [shape: bf16[256,256], index: 1, kind: input, shape index: {}]
  %s2 = inlined_call_operand.vmem [shape: f32[1,256], index: 2, kind: input, shape index: {}]
  %s3 = inlined_call_operand.hbm [shape: f32[8,256], index: 3, kind: output, shape index: {}]
  %s4 = sld [smem:[#allocation0]]
  $region30: #{tpu_custom_call.1} parent=0
    _
  %s6 = ssub.s32 1, %s4
  %s7 = scalar_select 0, %s6, %s4
  $region1: #{tpu_custom_call.1} parent=0
    #allocation2 [shape = 'u8[8192]{0}', space=vmem, size = 0x2000, scoped, tag = 'input window, operand 0, single buffered']
    #allocation3 [shape = 's32[1]{0}', space=sflag, size = 0x4, scoped, tag = 'scoped memory for tpu_custom_call.1']
    #allocation4 [shape = 's32[1]{0}', space=sflag, size = 0x4, scoped, tag = 'scoped memory for tpu_custom_call.1']
    #allocation5 [shape = 'u8[131072]{0}', space=vmem, size = 0x20000, scoped, tag = 'input window, operand 1, single buffered']
    #allocation6 [shape = 's32[1]{0}', space=sflag, size = 0x4, scoped, tag = 'scoped memory for tpu_custom_call.1']
    #allocation7 [shape = 'u8[8192]{0}', space=vmem, size = 0x2000, scoped, tag = 'output window, operand 0, single buffered']
    %8 = vsyncpa [#allocation3], 0
    %9 = vsyncpa [#allocation6], 0
    %10 = vsyncpa [#allocation4], 0
    // Predicated region
    $region2: #{tpu_custom_call.1} parent=1 // pred_check
      _
    $region3: #{tpu_custom_call.1} parent=1 // pred_check_branch
      %12 = sbr.rel (0) target = $region5
    $region4: #{tpu_custom_call.1} parent=1 // pred_region
      %s14 = ssub.s32 256, 256
      %15 = vsyncadd [#allocation3], %s14
      %s17 = sshll.u32 [#allocation2], 4
      %s18 = int_to_ptr.vmem [resolvable:$true] %s17
      %20 = dma.hbm_to_vmem [thread:$0]  %s0, 256, %s18, [#allocation3]
    $region5: #{tpu_custom_call.1} parent=1 // pred_fallthru
      _
    // Predicated region
    $region6: #{tpu_custom_call.1} parent=1 // pred_check
      _
    $region7: #{tpu_custom_call.1} parent=1 // pred_check_branch
      %22 = sbr.rel (0) target = $region9
    $region8: #{tpu_custom_call.1} parent=1 // pred_region
      %s24 = ssub.s32 4096, 4096
      %25 = vsyncadd [#allocation6], %s24
      %s26 = sshll.u32 [#allocation5], 4
      %s27 = int_to_ptr.vmem [resolvable:$true] %s26
      %32 = dma.hbm_to_vmem [thread:$0]  %s1, 4096, %s27, [#allocation6], 128, 128, 8
    $region9: #{tpu_custom_call.1} parent=1 // pred_fallthru
      _
    // Predicated region
    $region10: #{tpu_custom_call.1} parent=1 // pred_check
      _
    $region11: #{tpu_custom_call.1} parent=1 // pred_check_branch
      %34 = sbr.rel (0) target = $region13
    $region12: #{tpu_custom_call.1} parent=1 // pred_region
      _
    $region13: #{tpu_custom_call.1} parent=1 // pred_fallthru
      _
    // Predicated region
    $region14: #{tpu_custom_call.1} parent=1 // pred_check
      _
    $region15: #{tpu_custom_call.1} parent=1 // pred_check_branch
      %36 = sbr.rel (0) target = $region17
    $region16: #{tpu_custom_call.1} parent=1 // pred_region
      %37 = dma.done [#allocation3], 256
    $region17: #{tpu_custom_call.1} parent=1 // pred_fallthru
      _
    // Predicated region
    $region18: #{tpu_custom_call.1} parent=1 // pred_check
      _
    $region19: #{tpu_custom_call.1} parent=1 // pred_check_branch
      %39 = sbr.rel (0) target = $region21
    $region20: #{tpu_custom_call.1} parent=1 // pred_region
      %40 = dma.done [#allocation6], 4096
    $region21: #{tpu_custom_call.1} parent=1 // pred_fallthru
      _
    %v41 = vld [vmem:[#allocation2] sm:$0xff]
    %v42 = vld [vmem:[#allocation2 + $0x8] sm:$0xff]
    %v43 = vpack.c.bf16 %v41, %v41
    %v44 = vpack.c.bf16 %v42, %v42
    %v45 = vld [vmem:[#allocation5] sm:$0xff]
    %v46 = vld [vmem:[#allocation5 + $0x8] sm:$0xff]
    %v47 = vld [vmem:[#allocation5 + $0x10] sm:$0xff]
    %v48 = vld [vmem:[#allocation5 + $0x18] sm:$0xff]
    %v49 = vld [vmem:[#allocation5 + $0x20] sm:$0xff]
    %v50 = vld [vmem:[#allocation5 + $0x28] sm:$0xff]
    %v51 = vld [vmem:[#allocation5 + $0x30] sm:$0xff]
    %v52 = vld [vmem:[#allocation5 + $0x38] sm:$0xff]
    %v53 = vld [vmem:[#allocation5 + $0x40] sm:$0xff]
    %v54 = vld [vmem:[#allocation5 + $0x48] sm:$0xff]
    %v55 = vld [vmem:[#allocation5 + $0x50] sm:$0xff]
    %v56 = vld [vmem:[#allocation5 + $0x58] sm:$0xff]
    %v57 = vld [vmem:[#allocation5 + $0x60] sm:$0xff]
    %v58 = vld [vmem:[#allocation5 + $0x68] sm:$0xff]
    %v59 = vld [vmem:[#allocation5 + $0x70] sm:$0xff]
    %v60 = vld [vmem:[#allocation5 + $0x78] sm:$0xff]
    %v61 = vld [vmem:[#allocation5 + $0x80] sm:$0xff]
    %v62 = vld [vmem:[#allocation5 + $0x88] sm:$0xff]
    %v63 = vld [vmem:[#allocation5 + $0x90] sm:$0xff]
    %v64 = vld [vmem:[#allocation5 + $0x98] sm:$0xff]
    %v65 = vld [vmem:[#allocation5 + $0xa0] sm:$0xff]
    %v66 = vld [vmem:[#allocation5 + $0xa8] sm:$0xff]
    %v67 = vld [vmem:[#allocation5 + $0xb0] sm:$0xff]
    %v68 = vld [vmem:[#allocation5 + $0xb8] sm:$0xff]
    %v69 = vld [vmem:[#allocation5 + $0xc0] sm:$0xff]
    %v70 = vld [vmem:[#allocation5 + $0xc8] sm:$0xff]
    %v71 = vld [vmem:[#allocation5 + $0xd0] sm:$0xff]
    %v72 = vld [vmem:[#allocation5 + $0xd8] sm:$0xff]
    %v73 = vld [vmem:[#allocation5 + $0xe0] sm:$0xff]
    %v74 = vld [vmem:[#allocation5 + $0xe8] sm:$0xff]
    %v75 = vld [vmem:[#allocation5 + $0xf0] sm:$0xff]
    %v76 = vld [vmem:[#allocation5 + $0xf8] sm:$0xff]
    %v77 = vld [vmem:[%s2] sm:$0x3]
    %v79 = vlaneseq
    %v80 = vshrl.u32 %v79, 7
    %v81 = vsub.s32 0, %v80
    %v82 = vrot.slane %v77, %v81
    %v83 = vlaneseq
    %v84 = vshrl.u32 %v83, 7
    %v85 = vsub.s32 1, %v84
    %v86 = vrot.slane %v77, %v85
    %v121 = vunpack.c.l.b16 %v45
    %v122 = vunpack.c.h.b16 %v45
    %v123 = vunpack.c.l.b16 %v46
    %v124 = vunpack.c.h.b16 %v46
    %v125 = vunpack.c.l.b16 %v47
    %v126 = vunpack.c.h.b16 %v47
    %v127 = vunpack.c.l.b16 %v48
    %v128 = vunpack.c.h.b16 %v48
    %v129 = vunpack.c.l.b16 %v49
    %v130 = vunpack.c.h.b16 %v49
    %v131 = vunpack.c.l.b16 %v50
    %v132 = vunpack.c.h.b16 %v50
    %v133 = vunpack.c.l.b16 %v51
    %v134 = vunpack.c.h.b16 %v51
    %v135 = vunpack.c.l.b16 %v52
    %v136 = vunpack.c.h.b16 %v52
    %v137 = vunpack.c.l.b16 %v53
    %v138 = vunpack.c.h.b16 %v53
    %v139 = vunpack.c.l.b16 %v54
    %v140 = vunpack.c.h.b16 %v54
    %v141 = vunpack.c.l.b16 %v55
    %v142 = vunpack.c.h.b16 %v55
    %v143 = vunpack.c.l.b16 %v56
    %v144 = vunpack.c.h.b16 %v56
    %v145 = vunpack.c.l.b16 %v57
    %v146 = vunpack.c.h.b16 %v57
    %v147 = vunpack.c.l.b16 %v58
    %v148 = vunpack.c.h.b16 %v58
    %v149 = vunpack.c.l.b16 %v59
    %v150 = vunpack.c.h.b16 %v59
    %v151 = vunpack.c.l.b16 %v60
    %v152 = vunpack.c.h.b16 %v60
    %v153 = vunpack.c.l.b16 %v61
    %v154 = vunpack.c.h.b16 %v61
    %v155 = vunpack.c.l.b16 %v62
    %v156 = vunpack.c.h.b16 %v62
    %v157 = vunpack.c.l.b16 %v63
    %v158 = vunpack.c.h.b16 %v63
    %v159 = vunpack.c.l.b16 %v64
    %v160 = vunpack.c.h.b16 %v64
    %v161 = vunpack.c.l.b16 %v65
    %v162 = vunpack.c.h.b16 %v65
    %v163 = vunpack.c.l.b16 %v66
    %v164 = vunpack.c.h.b16 %v66
    %v165 = vunpack.c.l.b16 %v67
    %v166 = vunpack.c.h.b16 %v67
    %v167 = vunpack.c.l.b16 %v68
    %v168 = vunpack.c.h.b16 %v68
    %v169 = vunpack.c.l.b16 %v69
    %v170 = vunpack.c.h.b16 %v69
    %v171 = vunpack.c.l.b16 %v70
    %v172 = vunpack.c.h.b16 %v70
    %v173 = vunpack.c.l.b16 %v71
    %v174 = vunpack.c.h.b16 %v71
    %v175 = vunpack.c.l.b16 %v72
    %v176 = vunpack.c.h.b16 %v72
    %v177 = vunpack.c.l.b16 %v73
    %v178 = vunpack.c.h.b16 %v73
    %v179 = vunpack.c.l.b16 %v74
    %v180 = vunpack.c.h.b16 %v74
    %v181 = vunpack.c.l.b16 %v75
    %v182 = vunpack.c.h.b16 %v75
    %v183 = vunpack.c.l.b16 %v76
    %v184 = vunpack.c.h.b16 %v76
    %v185 = vpack.c.b16 %v123, %v121
    %v186 = vpack.c.b16 %v124, %v122
    %v187 = vpack.c.b16 %v127, %v125
    %v188 = vpack.c.b16 %v128, %v126
    %v189 = vpack.c.b16 %v131, %v129
    %v190 = vpack.c.b16 %v132, %v130
    %v191 = vpack.c.b16 %v135, %v133
    %v192 = vpack.c.b16 %v136, %v134
    %v193 = vpack.c.b16 %v139, %v137
    %v194 = vpack.c.b16 %v140, %v138
    %v195 = vpack.c.b16 %v143, %v141
    %v196 = vpack.c.b16 %v144, %v142
    %v197 = vpack.c.b16 %v147, %v145
    %v198 = vpack.c.b16 %v148, %v146
    %v199 = vpack.c.b16 %v151, %v149
    %v200 = vpack.c.b16 %v152, %v150
    %v201 = vpack.c.b16 %v155, %v153
    %v202 = vpack.c.b16 %v156, %v154
    %v203 = vpack.c.b16 %v159, %v157
    %v204 = vpack.c.b16 %v160, %v158
    %v205 = vpack.c.b16 %v163, %v161
    %v206 = vpack.c.b16 %v164, %v162
    %v207 = vpack.c.b16 %v167, %v165
    %v208 = vpack.c.b16 %v168, %v166
    %v209 = vpack.c.b16 %v171, %v169
    %v210 = vpack.c.b16 %v172, %v170
    %v211 = vpack.c.b16 %v175, %v173
    %v212 = vpack.c.b16 %v176, %v174
    %v213 = vpack.c.b16 %v179, %v177
    %v214 = vpack.c.b16 %v180, %v178
    %v215 = vpack.c.b16 %v183, %v181
    %v216 = vpack.c.b16 %v184, %v182
    %249 = vmatprep.subr.bf16.mxu0 %v186
    %250 = vmatpush1.bf16.msra.mxu0 %v185
    %251 = vmatprep.subr.bf16.mxu0 %v188
    %252 = vmatpush1.bf16.msra.mxu0 %v187
    %253 = vmatprep.subr.bf16.mxu0 %v190
    %254 = vmatpush1.bf16.msra.mxu0 %v189
    %255 = vmatprep.subr.bf16.mxu0 %v192
    %256 = vmatpush1.bf16.msra.mxu0 %v191
    %257 = vmatprep.subr.bf16.mxu0 %v194
    %258 = vmatpush1.bf16.msra.mxu0 %v193
    %259 = vmatprep.subr.bf16.mxu0 %v196
    %260 = vmatpush1.bf16.msra.mxu0 %v195
    %261 = vmatprep.subr.bf16.mxu0 %v198
    %262 = vmatpush1.bf16.msra.mxu0 %v197
    %263 = vmatprep.subr.bf16.mxu0 %v200
    %264 = vmatpush1.bf16.msra.mxu0 %v199
    %265 = vmatprep.subr.bf16.mxu0 %v202
    %266 = vmatpush1.bf16.msra.mxu0 %v201
    %267 = vmatprep.subr.bf16.mxu0 %v204
    %268 = vmatpush1.bf16.msra.mxu0 %v203
    %269 = vmatprep.subr.bf16.mxu0 %v206
    %270 = vmatpush1.bf16.msra.mxu0 %v205
    %271 = vmatprep.subr.bf16.mxu0 %v208
    %272 = vmatpush1.bf16.msra.mxu0 %v207
    %273 = vmatprep.subr.bf16.mxu0 %v210
    %274 = vmatpush1.bf16.msra.mxu0 %v209
    %275 = vmatprep.subr.bf16.mxu0 %v212
    %276 = vmatpush1.bf16.msra.mxu0 %v211
    %277 = vmatprep.subr.bf16.mxu0 %v214
    %278 = vmatpush1.bf16.msra.mxu0 %v213
    %279 = vmatprep.subr.bf16.mxu0 %v216
    %280 = vmatpush1.bf16.msra.mxu0 %v215
    %281 = vmatprep.mubr.bf16.mxu0 %v44
    %282 = vmatmul.mubr.bf16.gmra.mrb[0].mxu0 %v43
    %v283 = vpop.f32.mrb[0].mxu0
    %v284 = vadd.f32 %v82, %v283
    %v285 = vpop.f32.mrb[0].mxu0
    %v286 = vadd.f32 %v86, %v285
    %v287 = vpop.f32.mrb[0].mxu0
    %v288 = vpop.f32.mrb[0].mxu0
    %289 = vdwg.mxu0
    %v290 = vxor.u32 %v284, 2147483648
    %v291 = vxor.u32 %v286, 2147483648
    %v292 = vmul.f32 %v290, 1.442695
    %v293 = vpow.pop %v292
    %v294 = vmul.f32 %v291, 1.442695
    %v295 = vpow.pop %v294
    %v296 = vadd.f32 %v293, 1.0
    %v297 = vadd.f32 %v295, 1.0
    %v298 = vrcp.pop %v296
    %v299 = vmul.f32 1.0, %v298
    %v300 = vrcp.pop %v297
    %v301 = vmul.f32 1.0, %v300
    %302 = vst [vmem:[#allocation7] sm:$0xff] %v299
    %303 = vst [vmem:[#allocation7 + $0x8] sm:$0xff] %v301
    // Predicated region
    $region22: #{tpu_custom_call.1} parent=1 // pred_check
      _
    $region23: #{tpu_custom_call.1} parent=1 // pred_check_branch
      %305 = sbr.rel (0) target = $region25
    $region24: #{tpu_custom_call.1} parent=1 // pred_region
      %s307 = ssub.s32 256, 256
      %308 = vsyncadd [#allocation4], %s307
      %s310 = sshll.u32 [#allocation7], 4
      %s311 = int_to_ptr.vmem [resolvable:$true] %s310
      %313 = dma.vmem_to_hbm [thread:$0]  %s311, 256, %s3, [#allocation4]
    $region25: #{tpu_custom_call.1} parent=1 // pred_fallthru
      _
    // Predicated region
    $region26: #{tpu_custom_call.1} parent=1 // pred_check
      _
    $region27: #{tpu_custom_call.1} parent=1 // pred_check_branch
      %315 = sbr.rel (0) target = $region29
    $region28: #{tpu_custom_call.1} parent=1 // pred_region
      %316 = dma.done [#allocation4], 256
    $region29: #{tpu_custom_call.1} parent=1 // pred_fallthru
      _
    %317 = vsyncpa [#allocation3], 1
    %318 = vsyncpa [#allocation6], 1
    %319 = vsyncpa [#allocation4], 1

</llo_original>
